<compile_context>
chip_gen: v7x
topology: tpu7x:2x2x1
jax: 0.10.0
libtpu: 0.0.40
codegen_flags: <defaults>
</compile_context>

<pallas_src>
import jax
import jax.numpy as jnp
from jax.experimental import pallas as pl
from jax.experimental.pallas import tpu as pltpu

TN = 256  # lane tile over M = N * H_out * W_out (last/minor dim of every tile)


# ----------------------------- glue helpers ---------------------------------

def _im2col(x_nhwc, k, stride):
    """x: (N, H, W, C) -> patches (N*Ho*Wo, k*k*C) with (di, dj, c) order."""
    N, H, W, C = x_nhwc.shape
    Ho = (H - k) // stride + 1
    Wo = (W - k) // stride + 1
    cols = []
    for di in range(k):
        for dj in range(k):
            cols.append(
                x_nhwc[:, di:di + stride * Ho:stride, dj:dj + stride * Wo:stride, :]
            )
    patches = jnp.concatenate(cols, axis=-1)  # (N, Ho, Wo, k*k*C)
    return patches.reshape(N * Ho * Wo, k * k * C), (N, Ho, Wo)


def _w_to_mat_T(w_oihw):
    """(Cout, Cin, kh, kw) -> (Cout, kh*kw*Cin), matching im2col (di, dj, c)."""
    cout = w_oihw.shape[0]
    return jnp.transpose(w_oihw, (0, 2, 3, 1)).reshape(cout, -1)


def _pad_cols(a, multiple):
    """Pad the last (lane) dim of a (K, M) array up to a multiple."""
    m = a.shape[1]
    mp = ((m + multiple - 1) // multiple) * multiple
    return jnp.pad(a, ((0, 0), (0, mp - m)))


# ----------------------------- Pallas kernels --------------------------------

def _gate_kernel(w_ref, gp_ref, p_ref, u_ref):
    # w_ref : (Cout, Kg)  bf16   -- [wa | wb] stacked along K
    # gp_ref: (Cout, 8)   f32    -- columns [w0, w1, w2, w3, w4, bias, 0, 0]
    # p_ref : (Kg, TN)    bf16   -- [x_top patch ; x_lat patch] stacked along K
    # u_ref : (Cout, TN)  f32
    upre = jnp.dot(w_ref[...], p_ref[...], preferred_element_type=jnp.float32)
    gp = gp_ref[...]
    w0 = gp[:, 0:1]
    w1 = gp[:, 1:2]
    w2 = gp[:, 2:3]
    w3 = gp[:, 3:4]
    w4 = gp[:, 4:5]
    bias = gp[:, 5:6]
    upre = upre + bias
    # u = relu(w0 * sigmoid(w1 * u_pre + w2) + w3 * u_pre + w4)   (all f32)
    u_ref[...] = jnp.maximum(
        w0 * jax.nn.sigmoid(w1 * upre + w2) + w3 * upre + w4, 0.0)


def _head_kernel(w_ref, p_ref, y_ref, mu1_ref, mu2_ref, std_ref):
    # w_ref : (3*Cout, Kh) bf16  -- [W1 ; W2 ; Wstd] stacked along Cout
    # p_ref : (Kh, TN)     bf16
    # outputs: (Cout, TN)  f32 each
    cout = mu1_ref.shape[0]
    acc = jnp.dot(w_ref[...], p_ref[...], preferred_element_type=jnp.float32)
    mu1 = acc[0:cout, :]
    mu2 = acc[cout:2 * cout, :]
    std = jax.nn.sigmoid(acc[2 * cout:3 * cout, :])
    y_ref[...] = mu1 * std + mu2 * (1.0 - std)
    mu1_ref[...] = mu1
    mu2_ref[...] = mu2
    std_ref[...] = std


def _run_gate(w_gate, gp, p_gate):
    cout, kg = w_gate.shape
    mp = p_gate.shape[1]
    grid = (mp // TN,)
    return pl.pallas_call(
        _gate_kernel,
        out_shape=jax.ShapeDtypeStruct((cout, mp), jnp.float32),
        grid=grid,
        in_specs=[
            pl.BlockSpec((cout, kg), lambda i: (0, 0)),       # weights (resident)
            pl.BlockSpec((cout, 8), lambda i: (0, 0)),        # gate params + bias
            pl.BlockSpec((kg, TN), lambda i: (0, i)),         # fused patch tile
        ],
        out_specs=pl.BlockSpec((cout, TN), lambda i: (0, i)),
        compiler_params=pltpu.CompilerParams(dimension_semantics=("parallel",)),
    )(w_gate, gp, p_gate)


def _run_head(w_head, p_head, cout):
    kh = w_head.shape[1]
    mp = p_head.shape[1]
    grid = (mp // TN,)
    out_sds = jax.ShapeDtypeStruct((cout, mp), jnp.float32)
    return pl.pallas_call(
        _head_kernel,
        out_shape=(out_sds, out_sds, out_sds, out_sds),
        grid=grid,
        in_specs=[
            pl.BlockSpec((3 * cout, kh), lambda i: (0, 0)),   # fused [W1;W2;Wstd]
            pl.BlockSpec((kh, TN), lambda i: (0, i)),
        ],
        out_specs=tuple(
            pl.BlockSpec((cout, TN), lambda i: (0, i)) for _ in range(4)),
        compiler_params=pltpu.CompilerParams(dimension_semantics=("parallel",)),
    )(w_head, p_head)


# ----------------------------- forward wrapper --------------------------------

def convg3_forward(x_top, x_lat, params, k, stride):
    """x_top, x_lat: (N, Cin, H, W) f32. Returns (y, u, (mu1, mu2, std)) in NCHW."""
    cout = params["a1"].shape[0]

    xt = jnp.transpose(x_top, (0, 2, 3, 1))  # NCHW -> NHWC
    xl = jnp.transpose(x_lat, (0, 2, 3, 1))

    ptop, (N, Ho, Wo) = _im2col(xt, k, stride)   # (M, k*k*Cin)
    plat, _ = _im2col(xl, k, stride)
    M = ptop.shape[0]

    # Fused, transposed, lane-dense gate operands.
    p_gate = jnp.concatenate([ptop, plat], axis=1).T          # (Kg=2*k*k*Cin, M)
    p_gate = _pad_cols(p_gate, 2 * TN).astype(jnp.bfloat16)   # even grid for v7x
    w_gate = jnp.concatenate(
        [_w_to_mat_T(params["a1"]), _w_to_mat_T(params["b1_w"])],
        axis=1).astype(jnp.bfloat16)                          # (Cout, Kg)
    zeros = jnp.zeros_like(params["b1_b"])
    gp = jnp.stack([params["w0"], params["w1"], params["w2"], params["w3"],
                    params["w4"], params["b1_b"], zeros, zeros],
                   axis=1).astype(jnp.float32)                # (Cout, 8)

    u_t = _run_gate(w_gate, gp, p_gate)                       # (Cout, Mp) f32
    u_lin = u_t[:, :M]                                        # (Cout, M)
    u_nhwc = jnp.transpose(u_lin.reshape(cout, N, Ho, Wo), (1, 2, 3, 0))
    u = jnp.transpose(u_nhwc, (0, 3, 1, 2))                   # NCHW for return

    # Head: one fused dot over [W1;W2;Wstd].
    pu, (N2, Ho2, Wo2) = _im2col(u_nhwc, k, stride)           # (M2, k*k*Cout)
    M2 = pu.shape[0]
    p_head = _pad_cols(pu.T, 2 * TN).astype(jnp.bfloat16)     # (Kh, Mp2)
    w_head = jnp.concatenate(
        [_w_to_mat_T(params["W1"]),
         _w_to_mat_T(params["W2"]),
         _w_to_mat_T(params["Wstd"])], axis=0).astype(jnp.bfloat16)  # (3*Cout, Kh)

    y_t, mu1_t, mu2_t, std_t = _run_head(w_head, p_head, cout)

    def to_nchw(a_t):
        return jnp.transpose(a_t[:, :M2].reshape(cout, N2, Ho2, Wo2), (1, 0, 2, 3))

    return to_nchw(y_t), u, (to_nchw(mu1_t), to_nchw(mu2_t), to_nchw(std_t))


# ----------------------------- pure-JAX reference ------------------------------

def _ref_forward(x_top, x_lat, params, k, stride):
    def conv(x, w):
        return jax.lax.conv_general_dilated(
            x, w, (stride, stride), "VALID",
            dimension_numbers=("NCHW", "OIHW", "NCHW"))

    u_pre = (conv(x_top, params["a1"]) + conv(x_lat, params["b1_w"])
             + params["b1_b"].reshape(1, -1, 1, 1))
    w = [params[f"w{i}"].reshape(1, -1, 1, 1) for i in range(5)]
    u = jnp.maximum(w[0] * jax.nn.sigmoid(w[1] * u_pre + w[2]) + w[3] * u_pre + w[4], 0.0)
    mu1 = conv(u, params["W1"])
    mu2 = conv(u, params["W2"])
    std = jax.nn.sigmoid(conv(u, params["Wstd"]))
    y = mu1 * std + mu2 * (1.0 - std)
    return y, u, (mu1, mu2, std)


# ----------------------------------- main --------------------------------------

if __name__ == "__main__":
    key = jax.random.PRNGKey(0)
    N, Cin, Cout, H, W, K, STRIDE = 2, 4, 8, 16, 16, 3, 1

    keys = jax.random.split(key, 12)
    scale = 0.15
    # Conv weights (OIHW), deterministic random.
    params = {
        "a1":   jax.random.uniform(keys[0], (Cout, Cin, K, K), jnp.float32, -scale, scale),
        "b1_w": jax.random.uniform(keys[1], (Cout, Cin, K, K), jnp.float32, -scale, scale),
        "b1_b": jax.random.uniform(keys[2], (Cout,), jnp.float32, -scale, scale),
        "W1":   jax.random.uniform(keys[3], (Cout, Cout, K, K), jnp.float32, -scale, scale),
        "W2":   jax.random.uniform(keys[4], (Cout, Cout, K, K), jnp.float32, -scale, scale),
        "Wstd": jax.random.uniform(keys[5], (Cout, Cout, K, K), jnp.float32, -scale, scale),
    }
    # Module init is w0=w2=w3=w4=0, w1=1 (which makes u identically 0); use small
    # deterministic random values instead so the gating path is actually exercised.
    for i in range(5):
        params[f"w{i}"] = jax.random.uniform(keys[6 + i], (Cout,), jnp.float32, -0.5, 0.5)

    x_top = jax.random.normal(keys[11], (N, Cin, H, W), jnp.float32)
    x_lat = jax.random.normal(jax.random.fold_in(keys[11], 1), (N, Cin, H, W), jnp.float32)

    y, u, (mu1, mu2, std) = convg3_forward(x_top, x_lat, params, K, STRIDE)
    jax.block_until_ready((y, u, mu1, mu2, std))

    # Correctness check against a pure-JAX (lax.conv, all-f32) reference.
    # Tolerance sized for bf16 MXU operands with f32 accumulation.
    yr, ur, (mu1r, mu2r, stdr) = _ref_forward(x_top, x_lat, params, K, STRIDE)
    for got, ref in [(y, yr), (u, ur), (mu1, mu1r), (mu2, mu2r), (std, stdr)]:
        assert got.shape == ref.shape
        assert jnp.allclose(got, ref, rtol=3e-2, atol=3e-2), float(jnp.max(jnp.abs(got - ref)))

    print("KERNEL_OK")
</pallas_src>

<mosaic_0001>
module attributes {stable_mosaic.version = 11 : i64} {
  func.func @_gate_kernel(%arg0: i32, %arg1: memref<8x72xbf16, #tpu.memory_space<vmem>>, %arg2: memref<8x8xf32, #tpu.memory_space<vmem>>, %arg3: memref<72x256xbf16, #tpu.memory_space<vmem>>, %arg4: memref<8x256xf32, #tpu.memory_space<vmem>>) attributes {dimension_semantics = [#tpu.dimension_semantics<parallel>], iteration_bounds = array<i64: 2>, scalar_prefetch = 0 : i64, scratch_operands = 0 : i64, tpu.core_type = #tpu.core_type<tc>, window_params = [{pipeline_mode = #tpu.pipeline_mode<synchronous>, transform_indices = @transform_0, window_bounds = array<i64: 8, 72>}, {pipeline_mode = #tpu.pipeline_mode<synchronous>, transform_indices = @transform_1, window_bounds = array<i64: 8, 8>}, {transform_indices = @transform_2, window_bounds = array<i64: 72, 256>}, {transform_indices = @transform_3, window_bounds = array<i64: 8, 256>}]} {
    %c0 = arith.constant 0 : index
    %c0_0 = arith.constant 0 : index
    %0 = vector.load %arg1[%c0, %c0_0] : memref<8x72xbf16, #tpu.memory_space<vmem>>, vector<8x72xbf16>
    %c0_1 = arith.constant 0 : index
    %c0_2 = arith.constant 0 : index
    %1 = vector.load %arg3[%c0_1, %c0_2] : memref<72x256xbf16, #tpu.memory_space<vmem>>, vector<72x256xbf16>
    %cst = arith.constant dense<0.000000e+00> : vector<8x256xf32>
    %2 = tpu.matmul %0, %1, %cst {dimension_numbers = #tpu.dot_dimension_numbers<[1], [0], [0], [1], [0, 0, 1, 1], [], []>} : vector<8x72xbf16>, vector<72x256xbf16>, vector<8x256xf32> -> vector<8x256xf32>
    %c0_3 = arith.constant 0 : index
    %c0_4 = arith.constant 0 : index
    %3 = vector.load %arg2[%c0_3, %c0_4] : memref<8x8xf32, #tpu.memory_space<vmem>>, vector<8x8xf32>
    %4 = vector.extract_strided_slice %3 {offsets = [0, 0], sizes = [8, 1], strides = [1, 1]} : vector<8x8xf32> to vector<8x1xf32>
    %5 = vector.extract_strided_slice %3 {offsets = [0, 1], sizes = [8, 1], strides = [1, 1]} : vector<8x8xf32> to vector<8x1xf32>
    %6 = vector.extract_strided_slice %3 {offsets = [0, 2], sizes = [8, 1], strides = [1, 1]} : vector<8x8xf32> to vector<8x1xf32>
    %7 = vector.extract_strided_slice %3 {offsets = [0, 3], sizes = [8, 1], strides = [1, 1]} : vector<8x8xf32> to vector<8x1xf32>
    %8 = vector.extract_strided_slice %3 {offsets = [0, 4], sizes = [8, 1], strides = [1, 1]} : vector<8x8xf32> to vector<8x1xf32>
    %9 = vector.extract_strided_slice %3 {offsets = [0, 5], sizes = [8, 1], strides = [1, 1]} : vector<8x8xf32> to vector<8x1xf32>
    %10 = vector.broadcast %9 : vector<8x1xf32> to vector<8x256xf32>
    %11 = arith.addf %2, %10 : vector<8x256xf32>
    %12 = vector.broadcast %5 : vector<8x1xf32> to vector<8x256xf32>
    %13 = arith.mulf %12, %11 : vector<8x256xf32>
    %14 = vector.broadcast %6 : vector<8x1xf32> to vector<8x256xf32>
    %15 = arith.addf %13, %14 : vector<8x256xf32>
    %16 = arith.negf %15 : vector<8x256xf32>
    %17 = math.exp %16 : vector<8x256xf32>
    %cst_5 = arith.constant 1.000000e+00 : f32
    %18 = vector.broadcast %cst_5 : f32 to vector<8x256xf32>
    %19 = arith.addf %18, %17 : vector<8x256xf32>
    %20 = arith.divf %18, %19 : vector<8x256xf32>
    %21 = vector.broadcast %4 : vector<8x1xf32> to vector<8x256xf32>
    %22 = arith.mulf %21, %20 : vector<8x256xf32>
    %23 = vector.broadcast %7 : vector<8x1xf32> to vector<8x256xf32>
    %24 = arith.mulf %23, %11 : vector<8x256xf32>
    %25 = arith.addf %22, %24 : vector<8x256xf32>
    %26 = vector.broadcast %8 : vector<8x1xf32> to vector<8x256xf32>
    %27 = arith.addf %25, %26 : vector<8x256xf32>
    %cst_6 = arith.constant 0.000000e+00 : f32
    %28 = vector.broadcast %cst_6 : f32 to vector<8x256xf32>
    %29 = arith.maximumf %27, %28 : vector<8x256xf32>
    %c0_7 = arith.constant 0 : index
    %c0_8 = arith.constant 0 : index
    %30 = vector.load %arg4[%c0_7, %c0_8] : memref<8x256xf32, #tpu.memory_space<vmem>>, vector<8x256xf32>
    tpu.vector_store %arg4[%c0_7, %c0_8], %29 {strides = array<i32>} : memref<8x256xf32, #tpu.memory_space<vmem>>, vector<8x256xf32>,
    return
  }
  func.func @transform_0(%arg0: i32) -> (i32, i32) {
    %c0_i32 = arith.constant 0 : i32
    %c0_i32_0 = arith.constant 0 : i32
    %c0_i32_1 = arith.constant 0 : i32
    return %c0_i32, %c0_i32_0 : i32, i32
  }
  func.func @transform_1(%arg0: i32) -> (i32, i32) {
    %c0_i32 = arith.constant 0 : i32
    %c0_i32_0 = arith.constant 0 : i32
    %c0_i32_1 = arith.constant 0 : i32
    return %c0_i32, %c0_i32_0 : i32, i32
  }
  func.func @transform_2(%arg0: i32) -> (i32, i32) {
    %c0_i32 = arith.constant 0 : i32
    %c0_i32_0 = arith.constant 0 : i32
    return %c0_i32, %arg0 : i32, i32
  }
  func.func @transform_3(%arg0: i32) -> (i32, i32) {
    %c0_i32 = arith.constant 0 : i32
    %c0_i32_0 = arith.constant 0 : i32
    return %c0_i32, %arg0 : i32, i32
  }
}

</mosaic_0001>

<llo_original>
// kernel: tpu_custom_call.1
$region0: #{tpu_custom_call.1}
  #allocation0 [shape = 'u32[]', space=smem, size = 0x4, offset = 0x4, fixed_abs, tag = 'smem constant byte address 0x4 - core index']
  #allocation1 [shape = 'u32[144,128]{1,0:T(1,128)}', space=vmem, size = 0x12000, scoped, tag = 'internal scratch']
  %s0 = inlined_call_operand.hbm [shape: bf16[8,72], index: 0, kind: input, shape index: {}]
  %s1 = inlined_call_operand.hbm [shape: f32[8,8], index: 1, kind: input, shape index: {}]
  %s2 = inlined_call_operand.hbm [shape: bf16[72,512], index: 2, kind: input, shape index: {}]
  %s3 = inlined_call_operand.hbm [shape: f32[8,512], index: 3, kind: output, shape index: {}]
  %s4 = sld [smem:[#allocation0]]
  $region57: #{tpu_custom_call.1} parent=0
    _
  %s6 = ssub.s32 1, %s4
  %s7 = scalar_select 0, %s6, %s4
  $region1: #{tpu_custom_call.1} parent=0
    #allocation2 [shape = 'u8[2048]{0}', space=vmem, size = 0x800, scoped, tag = 'input window, operand 0, single buffered']
    #allocation3 [shape = 's32[2]{0}', space=sflag, size = 0x8, scoped, tag = 'scoped memory for tpu_custom_call.1']
    #allocation4 [shape = 's32[2]{0}', space=sflag, size = 0x8, scoped, tag = 'scoped memory for tpu_custom_call.1']
    #allocation5 [shape = 'u8[4096]{0}', space=vmem, size = 0x1000, scoped, tag = 'input window, operand 1, single buffered']
    #allocation6 [shape = 's32[1]{0}', space=sflag, size = 0x4, scoped, tag = 'scoped memory for tpu_custom_call.1']
    #allocation7 [shape = 'u8[73728]{0}', space=vmem, size = 0x12000, scoped, tag = 'input window, operand 2']
    #allocation8 [shape = 'u8[16384]{0}', space=vmem, size = 0x4000, scoped, tag = 'output window, operand 0']
    %8 = vsyncpa [#allocation3], 0
    %9 = vsyncpa [#allocation6], 0
    %10 = vsyncpa [#allocation4], 0
    %s11 = scalar_lea.sflag [#allocation4], 1
    %12 = vsyncpa %s11, 0
    loop: start=0, step=1, limit=4
    $region2: #{tpu_custom_call.1} parent=1 // loop_pre_header
      _
    $region3: #{tpu_custom_call.1} parent=1 // loop_header
      %s14 = sphi 0, %s18
      %p15 = scmp.ge.s32.totalorder %s14, 4
      %s22 = sphi 0, %s22
      %s24 = sphi 0, %s22
      %s25 = sphi 0, %s24
      %s39 = sphi 0, %s25
      %s43 = sphi 0, %s43
      %s45 = sphi 0, %s43
      %s46 = sphi 0, %s45
      %s60 = sphi 0, %s46
      %s66 = sphi 0, %s68
      %s69 = sphi 0, %s66
      %s70 = sphi 0, %s69
      %s86 = sphi 0, %s70
      %s92 = sphi 0, %s94
      %s95 = sphi 0, %s92
      %s96 = sphi 0, %s95
      %s112 = sphi 0, %s96
    $region4: #{tpu_custom_call.1} parent=1 // loop_header_branch
      %17 = sbr.rel (%p15) target = $region8
    $region5: #{tpu_custom_call.1} parent=1 // loop_body
      %s19 = ssub.s32 %s14, 1
      %s20 = ssub.s32 %s14, 2
      %s21 = sadd.s32 %s14, 1
      %s23 = sadd.s32 %s22, 1
      %p26 = scmp.eq.s32.totalorder %s14, 1
      %p27 = scmp.ne.s32.totalorder %s22, %s24
      %p28 = scmp.eq.s32.totalorder %s14, 0
      %p29 = por %p27, %p28
      %p30 = scmp.ne.s32.totalorder %s22, %s24
      %p31 = scmp.eq.s32.totalorder %s19, 1
      %p32 = por %p30, %p31
      %p33 = scmp.ne.s32.totalorder %s24, %s25
      %p34 = scmp.eq.s32.totalorder %s19, 0
      %p35 = por %p33, %p34
      %p36 = scmp.ne.s32.totalorder %s24, %s25
      %p37 = scmp.eq.s32.totalorder %s20, 1
      %p38 = por %p36, %p37
      %p40 = scmp.ne.s32.totalorder %s25, %s39
      %p41 = scmp.eq.s32.totalorder %s20, 0
      %p42 = por %p40, %p41
      %s44 = sadd.s32 %s43, 1
      %p47 = scmp.eq.s32.totalorder %s14, 1
      %p48 = scmp.ne.s32.totalorder %s43, %s45
      %p49 = scmp.eq.s32.totalorder %s14, 0
      %p50 = por %p48, %p49
      %p51 = scmp.ne.s32.totalorder %s43, %s45
      %p52 = scmp.eq.s32.totalorder %s19, 1
      %p53 = por %p51, %p52
      %p54 = scmp.ne.s32.totalorder %s45, %s46
      %p55 = scmp.eq.s32.totalorder %s19, 0
      %p56 = por %p54, %p55
      %p57 = scmp.ne.s32.totalorder %s45, %s46
      %p58 = scmp.eq.s32.totalorder %s20, 1
      %p59 = por %p57, %p58
      %p61 = scmp.ne.s32.totalorder %s46, %s60
      %p62 = scmp.eq.s32.totalorder %s20, 0
      %p63 = por %p61, %p62
      %s64 = ssub.s32 %s14, %s21
      %p65 = scmp.eq.s32.totalorder %s64, 0
      %s67 = sadd.s32 %s66, 1
      %s68 = scalar_select %p65, %s66, %s67
      %p71 = pneg %p65
      %p72 = scmp.eq.s32.totalorder %s14, 1
      %p73 = por %p71, %p72
      %p74 = scmp.ne.s32.totalorder %s66, %s69
      %p75 = scmp.eq.s32.totalorder %s14, 0
      %p76 = por %p74, %p75
      %p77 = scmp.ne.s32.totalorder %s66, %s69
      %p78 = scmp.eq.s32.totalorder %s19, 1
      %p79 = por %p77, %p78
      %p80 = scmp.ne.s32.totalorder %s69, %s70
      %p81 = scmp.eq.s32.totalorder %s19, 0
      %p82 = por %p80, %p81
      %p83 = scmp.ne.s32.totalorder %s69, %s70
      %p84 = scmp.eq.s32.totalorder %s20, 1
      %p85 = por %p83, %p84
      %p87 = scmp.ne.s32.totalorder %s70, %s86
      %p88 = scmp.eq.s32.totalorder %s20, 0
      %p89 = por %p87, %p88
      %s90 = ssub.s32 %s14, %s21
      %p91 = scmp.eq.s32.totalorder %s90, 0
      %s93 = sadd.s32 %s92, 1
      %s94 = scalar_select %p91, %s92, %s93
      %p97 = pneg %p91
      %p98 = scmp.eq.s32.totalorder %s14, 1
      %p99 = por %p97, %p98
      %p100 = scmp.ne.s32.totalorder %s92, %s95
      %p101 = scmp.eq.s32.totalorder %s14, 0
      %p102 = por %p100, %p101
      %p103 = scmp.ne.s32.totalorder %s92, %s95
      %p104 = scmp.eq.s32.totalorder %s19, 1
      %p105 = por %p103, %p104
      %p106 = scmp.ne.s32.totalorder %s95, %s96
      %p107 = scmp.eq.s32.totalorder %s19, 0
      %p108 = por %p106, %p107
      %p109 = scmp.ne.s32.totalorder %s95, %s96
      %p110 = scmp.eq.s32.totalorder %s20, 1
      %p111 = por %p109, %p110
      %p113 = scmp.ne.s32.totalorder %s96, %s112
      %p114 = scmp.eq.s32.totalorder %s20, 0
      %p115 = por %p113, %p114
      %p116 = scmp.le.s32.totalorder 1, %s14
      %p117 = scmp.lt.s32.totalorder %s14, 3
      %p118 = pnand %p116, %p117
      %p119 = pneg %p118
      // Predicated region
      $region9: #{tpu_custom_call.1} parent=5 // pred_check
        _
      $region10: #{tpu_custom_call.1} parent=5 // pred_check_branch
        %121 = sbr.rel (%p118) target = $region12
      $region11: #{tpu_custom_call.1} parent=5 // pred_region
        %s122 = ssub.s32 %s14, 1
        // Predicated region
        $region13: #{tpu_custom_call.1} parent=11 // pred_check
          %p123 = pneg %p35
        $region14: #{tpu_custom_call.1} parent=11 // pred_check_branch
          %125 = sbr.rel (%p123) target = $region16
        $region15: #{tpu_custom_call.1} parent=11 // pred_region
          %s127 = ssub.s32 64, 64
          %128 = vsyncadd [#allocation3], %s127
          %s130 = sshll.u32 [#allocation2], 4
          %s131 = int_to_ptr.vmem [resolvable:$true] %s130
          %133 = dma.hbm_to_vmem [thread:$0]  %s0, 64, %s131, [#allocation3]
        $region16: #{tpu_custom_call.1} parent=11 // pred_fallthru
          _
        // Predicated region
        $region17: #{tpu_custom_call.1} parent=11 // pred_check
          %p134 = pneg %p56
        $region18: #{tpu_custom_call.1} parent=11 // pred_check_branch
          %136 = sbr.rel (%p134) target = $region20
        $region19: #{tpu_custom_call.1} parent=11 // pred_region
          %s138 = ssub.s32 128, 128
          %139 = vsyncadd [#allocation6], %s138
          %s141 = sshll.u32 [#allocation5], 4
          %s142 = int_to_ptr.vmem [resolvable:$true] %s141
          %144 = dma.hbm_to_vmem [thread:$0]  %s1, 128, %s142, [#allocation6]
        $region20: #{tpu_custom_call.1} parent=11 // pred_fallthru
          _
      $region12: #{tpu_custom_call.1} parent=5 // pred_fallthru
        _
      %p145 = scmp.lt.s32.totalorder %s14, 2
      // Predicated region
      $region21: #{tpu_custom_call.1} parent=5 // pred_check
        %p146 = pneg %p145
      $region22: #{tpu_custom_call.1} parent=5 // pred_check_branch
        %148 = sbr.rel (%p146) target = $region24
      $region23: #{tpu_custom_call.1} parent=5 // pred_region
        // Predicated region
        $region25: #{tpu_custom_call.1} parent=23 // pred_check
          %p149 = pneg %p76
        $region26: #{tpu_custom_call.1} parent=23 // pred_check_branch
          %151 = sbr.rel (%p149) target = $region28
        $region27: #{tpu_custom_call.1} parent=23 // pred_region
          %s152 = sand.u32 %s14, 1
          %s153 = scalar_lea.sflag [#allocation3], %s152
          %s154 = sand.u32 %s66, 1
          %s155 = smul.addr %s154, 72
          %s156 = scalar_lea.vmem [#allocation7], %s155
          %s157 = smul.u32 2, %s14
          %s159 = ssub.s32 1152, 1152
          %160 = vsyncadd %s153, %s159
          %s161 = smul.addr %s157, 64
          %s162 = scalar_lea.hbm %s2, %s161
          %s163 = sshll.u32 %s156, 4
          %s164 = int_to_ptr.vmem [resolvable:$true] %s163
          %169 = dma.hbm_to_vmem [thread:$0]  %s162, 1152, %s164, %s153, 256, 128, 8
        $region28: #{tpu_custom_call.1} parent=23 // pred_fallthru
          _
      $region24: #{tpu_custom_call.1} parent=5 // pred_fallthru
        _
      %p170 = scmp.le.s32.totalorder 1, %s14
      %p171 = scmp.lt.s32.totalorder %s14, 3
      %p172 = pnand %p170, %p171
      %p173 = pneg %p172
      // Predicated region
      $region29: #{tpu_custom_call.1} parent=5 // pred_check
        _
      $region30: #{tpu_custom_call.1} parent=5 // pred_check_branch
        %175 = sbr.rel (%p172) target = $region32
      $region31: #{tpu_custom_call.1} parent=5 // pred_region
        %s176 = ssub.s32 %s14, 1
        // Predicated region
        $region33: #{tpu_custom_call.1} parent=31 // pred_check
          %p177 = pneg %p35
        $region34: #{tpu_custom_call.1} parent=31 // pred_check_branch
          %179 = sbr.rel (%p177) target = $region36
        $region35: #{tpu_custom_call.1} parent=31 // pred_region
          %180 = dma.done [#allocation3], 64
        $region36: #{tpu_custom_call.1} parent=31 // pred_fallthru
          _
        // Predicated region
        $region37: #{tpu_custom_call.1} parent=31 // pred_check
          %p181 = pneg %p56
        $region38: #{tpu_custom_call.1} parent=31 // pred_check_branch
          %183 = sbr.rel (%p181) target = $region40
        $region39: #{tpu_custom_call.1} parent=31 // pred_region
          %184 = dma.done [#allocation6], 128
        $region40: #{tpu_custom_call.1} parent=31 // pred_fallthru
          _
        %s185 = sand.u32 %s19, 1
        %s186 = scalar_lea.sflag [#allocation3], %s185
        %s187 = sand.u32 %s69, 1
        %s188 = smul.addr %s187, 72
        %s189 = scalar_lea.vmem [#allocation7], %s188
        // Predicated region
        $region41: #{tpu_custom_call.1} parent=31 // pred_check
          %p190 = pneg %p82
        $region42: #{tpu_custom_call.1} parent=31 // pred_check_branch
          %192 = sbr.rel (%p190) target = $region44
        $region43: #{tpu_custom_call.1} parent=31 // pred_region
          %193 = dma.done %s186, 1152
        $region44: #{tpu_custom_call.1} parent=31 // pred_fallthru
          _
        %p194 = pneg %p35
        %p195 = pneg %p32
        %p196 = pneg %p56
        %p197 = pneg %p53
        %s198 = sand.u32 %s19, 1
        %s199 = scalar_lea.sflag [#allocation3], %s198
        %s200 = sand.u32 %s69, 1
        %s201 = smul.addr %s200, 72
        %s202 = scalar_lea.vmem [#allocation7], %s201
        %p203 = pneg %p82
        %p204 = pneg %p79
        %p205 = pneg %p108
        %p206 = pneg %p105
        %s207 = sand.u32 %s95, 1
        %s208 = scalar_lea.sflag [#allocation4], %s207
        %s209 = sand.u32 %s95, 1
        %s210 = smul.addr %s209, 16
        %s211 = scalar_lea.vmem [#allocation8], %s210
        %s212 = smul.u32 2, %s19
        %s213 = smul.u32 2, %s19
        %v215 = vld [vmem:[#allocation2] sm:$0xf]
        %v216 = vld [vmem:[%s189] sm:$0xff]
        %v217 = vld [vmem:[%s189 + $0x8] sm:$0xff]
        %v218 = vld [vmem:[%s189 + $0x10] sm:$0xff]
        %v219 = vld [vmem:[%s189 + $0x18] sm:$0xff]
        %v220 = vld [vmem:[%s189 + $0x20] sm:$0xff]
        %v221 = vld [vmem:[%s189 + $0x28] sm:$0xff]
        %v222 = vld [vmem:[%s189 + $0x30] sm:$0xff]
        %v223 = vld [vmem:[%s189 + $0x38] sm:$0xff]
        %v224 = vld [vmem:[%s189 + $0x40] sm:$0xff]
        %v225 = vld [vmem:[#allocation5] sm:$0xff]
        %227 = vset.pattern.permute.xlu0 5
        %228 = vperm.xlu0 %227, %v225
        %v229 = vpop.permute.xlu0 %228
        %v240 = vunpack.c.l.b16 %v216
        %v241 = vunpack.c.h.b16 %v216
        %v242 = vunpack.c.l.b16 %v217
        %v243 = vunpack.c.h.b16 %v217
        %v244 = vunpack.c.l.b16 %v218
        %v245 = vunpack.c.h.b16 %v218
        %v246 = vunpack.c.l.b16 %v219
        %v247 = vunpack.c.h.b16 %v219
        %v248 = vunpack.c.l.b16 %v220
        %v249 = vunpack.c.h.b16 %v220
        %v250 = vunpack.c.l.b16 %v221
        %v251 = vunpack.c.h.b16 %v221
        %v252 = vunpack.c.l.b16 %v222
        %v253 = vunpack.c.h.b16 %v222
        %v254 = vunpack.c.l.b16 %v223
        %v255 = vunpack.c.h.b16 %v223
        %v256 = vunpack.c.l.b16 %v224
        %v257 = vunpack.c.h.b16 %v224
        %v258 = vpack.c.b16 %v242, %v240
        %v259 = vpack.c.b16 %v243, %v241
        %v260 = vpack.c.b16 %v246, %v244
        %v261 = vpack.c.b16 %v247, %v245
        %v262 = vpack.c.b16 %v250, %v248
        %v263 = vpack.c.b16 %v251, %v249
        %v264 = vpack.c.b16 %v254, %v252
        %v265 = vpack.c.b16 %v255, %v253
        %v266 = vpack.c.b16 %v256, %v256
        %v267 = vpack.c.b16 %v257, %v257
        %vm276 = vcmask 588800
        %v278 = vsel %vm276, %v215, 0
        %vm280 = vcmask 1043456
        %v282 = vsel %vm280, %v266, 0
        %v285 = vsel %vm280, %v267, 0
        %287 = vmatprep.subr.bf16.mxu0 %v259
        %288 = vmatpush1.bf16.msra.mxu0 %v258
        %289 = vmatprep.subr.bf16.mxu0 %v261
        %290 = vmatpush1.bf16.msra.mxu0 %v260
        %291 = vmatprep.subr.bf16.mxu0 %v263
        %292 = vmatpush1.bf16.msra.mxu0 %v262
        %293 = vmatprep.subr.bf16.mxu0 %v265
        %294 = vmatpush1.bf16.msra.mxu0 %v264
        %295 = vmatprep.subr.bf16.mxu0 %v285
        %296 = vmatpush1.bf16.msra.mxu0 %v282
        %297 = vmatprep.subr.bf16.mxu0 0
        %298 = vmatpush1.bf16.msra.mxu0 0
        %299 = vmatprep.subr.bf16.mxu0 0
        %300 = vmatpush1.bf16.msra.mxu0 0
        %301 = vmatprep.subr.bf16.mxu0 0
        %302 = vmatpush1.bf16.msra.mxu0 0
        %303 = vmatprep.subr.bf16.mxu0 0
        %304 = vmatpush1.bf16.msra.mxu0 0
        %305 = vmatprep.subr.bf16.mxu0 0
        %306 = vmatpush1.bf16.msra.mxu0 0
        %307 = vmatprep.subr.bf16.mxu0 0
        %308 = vmatpush1.bf16.msra.mxu0 0
        %309 = vmatprep.subr.bf16.mxu0 0
        %310 = vmatpush1.bf16.msra.mxu0 0
        %311 = vmatprep.subr.bf16.mxu0 0
        %312 = vmatpush1.bf16.msra.mxu0 0
        %313 = vmatprep.subr.bf16.mxu0 0
        %314 = vmatpush1.bf16.msra.mxu0 0
        %315 = vmatprep.subr.bf16.mxu0 0
        %316 = vmatpush1.bf16.msra.mxu0 0
        %317 = vmatprep.subr.bf16.mxu0 0
        %318 = vmatpush1.bf16.msra.mxu0 0
        %319 = vmatprep.mubr.bf16.mxu0 0
        %320 = vmatmul.mubr.bf16.gmra.mrb[0].mxu0 %v278
        %v321 = vpop.f32.mrb[0].mxu0
        %v322 = vadd.f32 %v229, %v321
        %v323 = vpop.f32.mrb[0].mxu0
        %v324 = vadd.f32 %v229, %v323
        %v325 = vpop.f32.mrb[0].mxu0
        %v326 = vpop.f32.mrb[0].mxu0
        %327 = vdwg.mxu0
        %328 = vset.pattern.permute.xlu0 1
        %329 = vperm.xlu0 %328, %v225
        %v330 = vpop.permute.xlu0 %329
        %v332 = vmul.f32 %v330, %v322
        %v333 = vmul.f32 %v330, %v324
        %334 = vset.pattern.permute.xlu0 2
        %335 = vperm.xlu0 %334, %v225
        %v336 = vpop.permute.xlu0 %335
        %v338 = vadd.f32 %v332, %v336
        %v339 = vadd.f32 %v333, %v336
        %v340 = vxor.u32 %v338, 2147483648
        %v341 = vxor.u32 %v339, 2147483648
        %v342 = vmul.f32 %v340, 1.442695
        %v343 = vpow.pop %v342
        %v344 = vmul.f32 %v341, 1.442695
        %v345 = vpow.pop %v344
        %v346 = vadd.f32 %v343, 1.0
        %v347 = vadd.f32 %v345, 1.0
        %v348 = vrcp.pop %v346
        %v349 = vmul.f32 1.0, %v348
        %v350 = vrcp.pop %v347
        %v351 = vmul.f32 1.0, %v350
        %352 = vset.pattern.permute.xlu0 0
        %353 = vperm.xlu0 %352, %v225
        %v354 = vpop.permute.xlu0 %353
        %v356 = vmul.f32 %v354, %v349
        %v357 = vmul.f32 %v354, %v351
        %358 = vset.pattern.permute.xlu0 3
        %359 = vperm.xlu0 %358, %v225
        %v360 = vpop.permute.xlu0 %359
        %v362 = vmul.f32 %v360, %v322
        %v363 = vmul.f32 %v360, %v324
        %v364 = vadd.f32 %v356, %v362
        %v365 = vadd.f32 %v357, %v363
        %366 = vset.pattern.permute.xlu0 4
        %367 = vperm.xlu0 %366, %v225
        %v368 = vpop.permute.xlu0 %367
        %v370 = vadd.f32 %v364, %v368
        %v371 = vadd.f32 %v365, %v368
        %v372 = vmax.f32 %v370, 0.0
        %v373 = vmax.f32 %v371, 0.0
        %374 = vst [vmem:[%s211] sm:$0xff] %v372
        %375 = vst [vmem:[%s211 + $0x8] sm:$0xff] %v373
        %s376 = sand.u32 %s95, 1
        %s377 = scalar_lea.sflag [#allocation4], %s376
        %s378 = sand.u32 %s95, 1
        %s379 = smul.addr %s378, 16
        %s380 = scalar_lea.vmem [#allocation8], %s379
        // Predicated region
        $region45: #{tpu_custom_call.1} parent=31 // pred_check
          %p381 = pneg %p105
        $region46: #{tpu_custom_call.1} parent=31 // pred_check_branch
          %383 = sbr.rel (%p381) target = $region48
        $region47: #{tpu_custom_call.1} parent=31 // pred_region
          %s384 = smul.u32 2, %s19
          %s386 = ssub.s32 256, 256
          %387 = vsyncadd %s377, %s386
          %s388 = smul.addr %s384, 128
          %s389 = scalar_lea.hbm %s3, %s388
          %s391 = sshll.u32 %s380, 4
          %s392 = int_to_ptr.vmem [resolvable:$true] %s391
          %394 = dma.vmem_to_hbm [thread:$0]  %s392, 256, %s389, %s377
        $region48: #{tpu_custom_call.1} parent=31 // pred_fallthru
          _
      $region32: #{tpu_custom_call.1} parent=5 // pred_fallthru
        _
      %p395 = scmp.le.s32.totalorder 2, %s14
      // Predicated region
      $region49: #{tpu_custom_call.1} parent=5 // pred_check
        %p396 = pneg %p395
      $region50: #{tpu_custom_call.1} parent=5 // pred_check_branch
        %398 = sbr.rel (%p396) target = $region52
      $region51: #{tpu_custom_call.1} parent=5 // pred_region
        %s399 = ssub.s32 %s14, 2
        // Predicated region
        $region53: #{tpu_custom_call.1} parent=51 // pred_check
          %p400 = pneg %p111
        $region54: #{tpu_custom_call.1} parent=51 // pred_check_branch
          %402 = sbr.rel (%p400) target = $region56
        $region55: #{tpu_custom_call.1} parent=51 // pred_region
          %s403 = sand.u32 %s96, 1
          %s404 = scalar_lea.sflag [#allocation4], %s403
          %s405 = sand.u32 %s96, 1
          %s406 = smul.addr %s405, 16
          %s407 = scalar_lea.vmem [#allocation8], %s406
          %408 = dma.done %s404, 256
        $region56: #{tpu_custom_call.1} parent=51 // pred_fallthru
          _
      $region52: #{tpu_custom_call.1} parent=5 // pred_fallthru
        _
    $region6: #{tpu_custom_call.1} parent=1 // loop_footer
      %s18 = sadd.s32 1, %s14
    $region7: #{tpu_custom_call.1} parent=1 // loop_footer_branch
      %13 = sbr.rel target = $region3
    $region8: #{tpu_custom_call.1} parent=1 // loop_exit
      _
    %409 = vsyncpa [#allocation3], 1
    %s410 = scalar_lea.sflag [#allocation3], 1
    %411 = vsyncpa %s410, 1
    %412 = vsyncpa [#allocation6], 1
    %413 = vsyncpa [#allocation4], 1
    %s414 = scalar_lea.sflag [#allocation4], 1
    %415 = vsyncpa %s414, 1

</llo_original>
